<compile_context>
chip_gen: v7x
topology: tpu7x:2x2x1
jax: 0.10.0
libtpu: 0.0.40
codegen_flags: <defaults>
</compile_context>

<pallas_src>
import jax
import jax.numpy as jnp
from jax import lax
from jax.experimental import pallas as pl
from jax.experimental.pallas import tpu as pltpu


def _round_up(x, m):
    return (x + m - 1) // m * m


def _vmem_budgets():
    """Return (streaming_buffer_budget_bytes, vmem_limit_bytes) per generation."""
    try:
        cap = int(pltpu.get_tpu_info().vmem_capacity_bytes)
    except Exception:  # pragma: no cover - conservative fallback
        cap = 64 * 1024 * 1024
    if cap >= 100 * 1024 * 1024:        # v5e / v6e: 128 MiB physical VMEM
        return 72 * 1024 * 1024, 100 * 1024 * 1024
    else:                               # v7x: 64 MiB physical VMEM
        return 28 * 1024 * 1024, 48 * 1024 * 1024


def _choose_tile_n(n_nodes, n_h, budget_bytes):
    """Largest node tile whose double-buffered h_pl/h_mi + out buffers fit budget."""
    n_h_p = _round_up(n_h, 128)          # lane-padded feature width in VMEM
    # Per node row of VMEM:
    #   2 tensors x 2 pipeline buffers x n_h_p x 4 B  (counted at 4 B/elem so a
    #   bf16 stream still leaves room for its in-kernel f32 upcast temporary)
    # + 2 outputs x 2 buffers x 128 lanes x 4 B       (lane-padded (tile_n,1))
    per_row = 16 * n_h_p + 2048
    cap = max(128, (budget_bytes // per_row) // 128 * 128)
    if n_nodes <= cap:
        return n_nodes                   # single full-dim block per batch
    return cap                           # multiple of 128; last block partial


def _discriminator_kernel(wc_ref, hpl_ref, hmi_ref, sc1_ref, sc2_ref):
    # wc_ref:  (1, 1, n_h)       f32, c @ W^T row for the current batch
    # hpl_ref: (1, tile_n, n_h)  streamed positive samples
    # hmi_ref: (1, tile_n, n_h)  streamed negative samples
    # sc1_ref: (1, tile_n, 1)    f32 logits (positive)
    # sc2_ref: (1, tile_n, 1)    f32 logits (negative)
    wc = wc_ref[0].astype(jnp.float32)                       # (1, n_h)
    dn = (((1,), (1,)), ((), ()))                            # contract feature dim

    hpl = hpl_ref[0].astype(jnp.float32)                     # (tile_n, n_h)
    hmi = hmi_ref[0].astype(jnp.float32)

    # MXU-native orientation: big tile is the (M, K) LHS, never transposed.
    sc1_ref[0] = lax.dot_general(hpl, wc, dn, preferred_element_type=jnp.float32)
    sc2_ref[0] = lax.dot_general(hmi, wc, dn, preferred_element_type=jnp.float32)


def discriminator_forward(c, h_pl, h_mi, weight, bias, s_bias1=None, s_bias2=None,
                          *, force_pallas=False, tile_n=None):
    """c: (B, n_h); h_pl/h_mi: (B, N, n_h); weight: (n_h, n_h); bias: scalar."""
    B, N, n_h = h_pl.shape
    assert c.shape == (B, n_h)
    assert h_mi.shape == (B, N, n_h)

    # wc[b, i] = sum_j W[i, j] * c[b, j]; kept in f32 (tiny) to match PyTorch's
    # f32 bilinear intermediate even when activations are bf16.
    wc = jnp.einsum("bj,ij->bi",
                    c.astype(jnp.float32), weight.astype(jnp.float32))

    itemsize = jnp.dtype(h_pl.dtype).itemsize
    tiny = B * N * n_h * itemsize < (1 << 20)    # < 1 MiB of activations

    if tiny and not force_pallas:
        # Small-problem fallback: launch + tiling overhead would dominate.
        sc1 = jnp.einsum("bni,bi->bn", h_pl.astype(jnp.float32), wc)
        sc2 = jnp.einsum("bni,bi->bn", h_mi.astype(jnp.float32), wc)
    else:
        h_budget, vmem_limit = _vmem_budgets()
        if tile_n is None:
            tile_n = _choose_tile_n(N, n_h, h_budget)
        else:
            tile_n = N if tile_n >= N else max(128, (tile_n // 128) * 128)
        n_tiles = pl.cdiv(N, tile_n)

        wc_in = wc.reshape(B, 1, n_h)            # tiny, f32

        sc1, sc2 = pl.pallas_call(
            _discriminator_kernel,
            out_shape=(
                jax.ShapeDtypeStruct((B, N, 1), jnp.float32),
                jax.ShapeDtypeStruct((B, N, 1), jnp.float32),
            ),
            grid_spec=pltpu.PrefetchScalarGridSpec(
                num_scalar_prefetch=0,
                grid=(B, n_tiles),
                in_specs=[
                    pl.BlockSpec((1, 1, n_h), lambda b, t: (b, 0, 0)),        # wc
                    pl.BlockSpec((1, tile_n, n_h), lambda b, t: (b, t, 0)),   # h_pl
                    pl.BlockSpec((1, tile_n, n_h), lambda b, t: (b, t, 0)),   # h_mi
                ],
                out_specs=[
                    pl.BlockSpec((1, tile_n, 1), lambda b, t: (b, t, 0)),     # sc1
                    pl.BlockSpec((1, tile_n, 1), lambda b, t: (b, t, 0)),     # sc2
                ],
            ),
            compiler_params=pltpu.CompilerParams(
                # On v7x, the tile axis could be pltpu.CORE_PARALLEL to engage
                # both TensorCores' DMA streams; plain "parallel" is portable.
                dimension_semantics=("parallel", "parallel"),
                vmem_limit_bytes=vmem_limit,
            ),
        )(wc_in, h_pl, h_mi)
        sc1 = sc1[:, :, 0]
        sc2 = sc2[:, :, 0]

    bias_f = jnp.asarray(bias, jnp.float32)
    sc1 = sc1 + bias_f
    sc2 = sc2 + bias_f
    if s_bias1 is not None:
        sc1 = sc1 + s_bias1
    if s_bias2 is not None:
        sc2 = sc2 + s_bias2
    return jnp.concatenate([sc1, sc2], axis=1)   # (B, 2N)


def _reference(c, h_pl, h_mi, weight, bias):
    # Pure-JAX reference of nn.Bilinear + concat (for correctness check).
    sc1 = jnp.einsum("bni,ij,bj->bn", h_pl, weight, c) + bias
    sc2 = jnp.einsum("bni,ij,bj->bn", h_mi, weight, c) + bias
    return jnp.concatenate([sc1, sc2], axis=1)


if __name__ == "__main__":
    def make_inputs(key, B, N, n_h):
        k_c, k_pl, k_mi, k_w = jax.random.split(key, 4)
        c = jax.random.normal(k_c, (B, n_h), dtype=jnp.float32)
        h_pl = jax.random.normal(k_pl, (B, N, n_h), dtype=jnp.float32)
        h_mi = jax.random.normal(k_mi, (B, N, n_h), dtype=jnp.float32)
        # nn.Bilinear(n_h, n_h, 1): xavier_uniform_ weight, bias filled with 0.
        bound = (6.0 / (n_h * n_h + n_h)) ** 0.5
        weight = jax.random.uniform(k_w, (n_h, n_h), dtype=jnp.float32,
                                    minval=-bound, maxval=bound)
        bias = jnp.float32(0.0)
        return c, h_pl, h_mi, weight, bias

    # Test 1: module-native small shapes, forced through the Pallas kernel.
    c, h_pl, h_mi, w, b = make_inputs(jax.random.PRNGKey(0), 2, 8, 32)
    out = discriminator_forward(c, h_pl, h_mi, w, b, force_pallas=True)
    out = jax.block_until_ready(out)
    ref = _reference(c, h_pl, h_mi, w, b)
    assert out.shape == (2, 16)
    assert jnp.allclose(out, ref, atol=1e-4, rtol=1e-4), (
        f"max abs err {jnp.max(jnp.abs(out - ref))}")

    # Test 2: multi-tile path with a partial last node tile and n_h % 128 != 0.
    c, h_pl, h_mi, w, b = make_inputs(jax.random.PRNGKey(1), 2, 200, 96)
    out = discriminator_forward(c, h_pl, h_mi, w, b, force_pallas=True, tile_n=128)
    out = jax.block_until_ready(out)
    ref = _reference(c, h_pl, h_mi, w, b)
    assert out.shape == (2, 400)
    assert jnp.allclose(out, ref, atol=1e-3, rtol=1e-3), (
        f"max abs err {jnp.max(jnp.abs(out - ref))}")

    # Test 3: tiny-problem fallback path (plain XLA einsum).
    c, h_pl, h_mi, w, b = make_inputs(jax.random.PRNGKey(2), 2, 8, 32)
    out = jax.block_until_ready(discriminator_forward(c, h_pl, h_mi, w, b))
    ref = _reference(c, h_pl, h_mi, w, b)
    assert jnp.allclose(out, ref, atol=1e-4, rtol=1e-4)

    print("KERNEL_OK")
</pallas_src>

<mosaic_0001>
module attributes {stable_mosaic.version = 11 : i64} {
  func.func @_discriminator_kernel(%arg0: i32, %arg1: i32, %arg2: memref<1x1x32xf32, #tpu.memory_space<vmem>>, %arg3: memref<1x8x32xf32, #tpu.memory_space<vmem>>, %arg4: memref<1x8x32xf32, #tpu.memory_space<vmem>>, %arg5: memref<1x8x1xf32, #tpu.memory_space<vmem>>, %arg6: memref<1x8x1xf32, #tpu.memory_space<vmem>>) attributes {dimension_semantics = [#tpu.dimension_semantics<parallel>, #tpu.dimension_semantics<parallel>], iteration_bounds = array<i64: 2, 1>, scalar_prefetch = 0 : i64, scratch_operands = 0 : i64, tpu.core_type = #tpu.core_type<tc>, window_params = [{transform_indices = @transform_0, window_bounds = array<i64: 1, 1, 32>}, {transform_indices = @transform_1, window_bounds = array<i64: 1, 8, 32>}, {transform_indices = @transform_2, window_bounds = array<i64: 1, 8, 32>}, {transform_indices = @transform_3, window_bounds = array<i64: 1, 8, 1>}, {transform_indices = @transform_4, window_bounds = array<i64: 1, 8, 1>}]} {
    %c0 = arith.constant 0 : index
    %c0_0 = arith.constant 0 : index
    %c0_1 = arith.constant 0 : index
    %0 = vector.load %arg2[%c0, %c0_0, %c0_1] : memref<1x1x32xf32, #tpu.memory_space<vmem>>, vector<1x1x32xf32>
    %1 = vector.shape_cast %0 : vector<1x1x32xf32> to vector<1x32xf32>
    %c0_2 = arith.constant 0 : index
    %c0_3 = arith.constant 0 : index
    %c0_4 = arith.constant 0 : index
    %2 = vector.load %arg3[%c0_2, %c0_3, %c0_4] : memref<1x8x32xf32, #tpu.memory_space<vmem>>, vector<1x8x32xf32>
    %3 = vector.shape_cast %2 : vector<1x8x32xf32> to vector<8x32xf32>
    %c0_5 = arith.constant 0 : index
    %c0_6 = arith.constant 0 : index
    %c0_7 = arith.constant 0 : index
    %4 = vector.load %arg4[%c0_5, %c0_6, %c0_7] : memref<1x8x32xf32, #tpu.memory_space<vmem>>, vector<1x8x32xf32>
    %5 = vector.shape_cast %4 : vector<1x8x32xf32> to vector<8x32xf32>
    %cst = arith.constant dense<0.000000e+00> : vector<8x1xf32>
    %6 = tpu.matmul %3, %1, %cst {dimension_numbers = #tpu.dot_dimension_numbers<[1], [1], [0], [0], [0, 0, 1, 0], [], []>} : vector<8x32xf32>, vector<1x32xf32>, vector<8x1xf32> -> vector<8x1xf32>
    %c0_8 = arith.constant 0 : index
    %c0_9 = arith.constant 0 : index
    %c0_10 = arith.constant 0 : index
    %7 = vector.load %arg5[%c0_8, %c0_9, %c0_10] : memref<1x8x1xf32, #tpu.memory_space<vmem>>, vector<1x8x1xf32>
    %8 = vector.shape_cast %7 : vector<1x8x1xf32> to vector<8x1xf32>
    %9 = vector.shape_cast %6 : vector<8x1xf32> to vector<1x8x1xf32>
    tpu.vector_store %arg5[%c0_8, %c0_9, %c0_10], %9 {strides = array<i32>} : memref<1x8x1xf32, #tpu.memory_space<vmem>>, vector<1x8x1xf32>,
    %cst_11 = arith.constant dense<0.000000e+00> : vector<8x1xf32>
    %10 = tpu.matmul %5, %1, %cst_11 {dimension_numbers = #tpu.dot_dimension_numbers<[1], [1], [0], [0], [0, 0, 1, 0], [], []>} : vector<8x32xf32>, vector<1x32xf32>, vector<8x1xf32> -> vector<8x1xf32>
    %c0_12 = arith.constant 0 : index
    %c0_13 = arith.constant 0 : index
    %c0_14 = arith.constant 0 : index
    %11 = vector.load %arg6[%c0_12, %c0_13, %c0_14] : memref<1x8x1xf32, #tpu.memory_space<vmem>>, vector<1x8x1xf32>
    %12 = vector.shape_cast %11 : vector<1x8x1xf32> to vector<8x1xf32>
    %13 = vector.shape_cast %10 : vector<8x1xf32> to vector<1x8x1xf32>
    tpu.vector_store %arg6[%c0_12, %c0_13, %c0_14], %13 {strides = array<i32>} : memref<1x8x1xf32, #tpu.memory_space<vmem>>, vector<1x8x1xf32>,
    return
  }
  func.func @transform_0(%arg0: i32, %arg1: i32) -> (i32, i32, i32) {
    %c0_i32 = arith.constant 0 : i32
    %c0_i32_0 = arith.constant 0 : i32
    %c0_i32_1 = arith.constant 0 : i32
    return %arg0, %c0_i32, %c0_i32_0 : i32, i32, i32
  }
  func.func @transform_1(%arg0: i32, %arg1: i32) -> (i32, i32, i32) {
    %c0_i32 = arith.constant 0 : i32
    %c0_i32_0 = arith.constant 0 : i32
    return %arg0, %arg1, %c0_i32 : i32, i32, i32
  }
  func.func @transform_2(%arg0: i32, %arg1: i32) -> (i32, i32, i32) {
    %c0_i32 = arith.constant 0 : i32
    %c0_i32_0 = arith.constant 0 : i32
    return %arg0, %arg1, %c0_i32 : i32, i32, i32
  }
  func.func @transform_3(%arg0: i32, %arg1: i32) -> (i32, i32, i32) {
    %c0_i32 = arith.constant 0 : i32
    %c0_i32_0 = arith.constant 0 : i32
    return %arg0, %arg1, %c0_i32 : i32, i32, i32
  }
  func.func @transform_4(%arg0: i32, %arg1: i32) -> (i32, i32, i32) {
    %c0_i32 = arith.constant 0 : i32
    %c0_i32_0 = arith.constant 0 : i32
    return %arg0, %arg1, %c0_i32 : i32, i32, i32
  }
}

</mosaic_0001>

<llo_original>
// kernel: tpu_custom_call.1
$region0: #{tpu_custom_call.1}
  #allocation0 [shape = 'u32[]', space=smem, size = 0x4, offset = 0x4, fixed_abs, tag = 'smem constant byte address 0x4 - core index']
  #allocation1 [shape = 'u32[144,128]{1,0:T(1,128)}', space=vmem, size = 0x12000, scoped, tag = 'internal scratch']
  %s0 = inlined_call_operand.hbm [shape: f32[2,1,32], index: 0, kind: input, shape index: {}]
  %s1 = inlined_call_operand.hbm [shape: f32[2,8,32], index: 1, kind: input, shape index: {}]
  %s2 = inlined_call_operand.hbm [shape: f32[2,8,32], index: 2, kind: input, shape index: {}]
  %s3 = inlined_call_operand.vmem [shape: f32[2,8,1], index: 3, kind: output, shape index: {0}]
  %s4 = inlined_call_operand.vmem [shape: f32[2,8,1], index: 4, kind: output, shape index: {1}]
  %5 = xla_tuple %s3, %s4
  %s6 = sld [smem:[#allocation0]]
  $region65: #{tpu_custom_call.1} parent=0
    _
  %s8 = ssub.s32 1, %s6
  %s9 = scalar_select 0, %s8, %s6
  $region1: #{tpu_custom_call.1} parent=0
    #allocation2 [shape = 'u8[1024]{0}', space=vmem, size = 0x400, scoped, tag = 'input window, operand 0']
    #allocation3 [shape = 's32[2]{0}', space=sflag, size = 0x8, scoped, tag = 'scoped memory for tpu_custom_call.1']
    #allocation4 [shape = 'u8[8192]{0}', space=vmem, size = 0x2000, scoped, tag = 'input window, operand 1']
    #allocation5 [shape = 's32[2]{0}', space=sflag, size = 0x8, scoped, tag = 'scoped memory for tpu_custom_call.1']
    #allocation6 [shape = 'u8[8192]{0}', space=vmem, size = 0x2000, scoped, tag = 'input window, operand 2']
    %10 = vsyncpa [#allocation3], 0
    %s11 = scalar_lea.sflag [#allocation3], 1
    %12 = vsyncpa %s11, 0
    %13 = vsyncpa [#allocation5], 0
    %s14 = scalar_lea.sflag [#allocation5], 1
    %15 = vsyncpa %s14, 0
    loop: start=0, step=1, limit=4
    $region2: #{tpu_custom_call.1} parent=1 // loop_pre_header
      _
    $region3: #{tpu_custom_call.1} parent=1 // loop_header
      %s17 = sphi 0, %s21
      %p18 = scmp.ge.s32.totalorder %s17, 4
      %s24 = sphi 0, %s36
      %s25 = sphi 0, %s32
      %s26 = sphi 0, %s24
      %s27 = sphi 0, %s25
      %s28 = sphi 0, %s26
      %s29 = sphi 0, %s27
      %s39 = sphi 0, %s41
      %s42 = sphi 0, %s39
      %s43 = sphi 0, %s42
      %s59 = sphi 0, %s43
      %s67 = sphi 0, %s69
      %s70 = sphi 0, %s67
      %s71 = sphi 0, %s70
      %s87 = sphi 0, %s71
      %s95 = sphi 0, %s97
      %s98 = sphi 0, %s95
      %s99 = sphi 0, %s98
      %s115 = sphi 0, %s99
      %s123 = sphi 0, %s125
      %s126 = sphi 0, %s123
      %s127 = sphi 0, %s126
      %s143 = sphi 0, %s127
      %s151 = sphi 0, %s153
      %s154 = sphi 0, %s151
      %s155 = sphi 0, %s154
      %s171 = sphi 0, %s155
    $region4: #{tpu_custom_call.1} parent=1 // loop_header_branch
      %20 = sbr.rel (%p18) target = $region8
    $region5: #{tpu_custom_call.1} parent=1 // loop_body
      %s22 = ssub.s32 %s17, 1
      %s23 = ssub.s32 %s17, 2
      %s30 = sadd.s32 1, %s25
      %p31 = scmp.ge.s32.totalorder %s30, 1
      %s32 = scalar_select %p31, 0, %s30
      %s33 = sadd.s32 1, %s24
      %s34 = scalar_select %p31, %s33, %s24
      %p35 = scmp.ge.s32.totalorder %s34, 2
      %s36 = scalar_select %p35, 0, %s34
      %s37 = ssub.s32 %s24, %s36
      %p38 = scmp.eq.s32.totalorder %s37, 0
      %s40 = sadd.s32 %s39, 1
      %s41 = scalar_select %p38, %s39, %s40
      %p44 = pneg %p38
      %p45 = scmp.eq.s32.totalorder %s17, 1
      %p46 = por %p44, %p45
      %p47 = scmp.ne.s32.totalorder %s39, %s42
      %p48 = scmp.eq.s32.totalorder %s17, 0
      %p49 = por %p47, %p48
      %p50 = scmp.ne.s32.totalorder %s39, %s42
      %p51 = scmp.eq.s32.totalorder %s22, 1
      %p52 = por %p50, %p51
      %p53 = scmp.ne.s32.totalorder %s42, %s43
      %p54 = scmp.eq.s32.totalorder %s22, 0
      %p55 = por %p53, %p54
      %p56 = scmp.ne.s32.totalorder %s42, %s43
      %p57 = scmp.eq.s32.totalorder %s23, 1
      %p58 = por %p56, %p57
      %p60 = scmp.ne.s32.totalorder %s43, %s59
      %p61 = scmp.eq.s32.totalorder %s23, 0
      %p62 = por %p60, %p61
      %s63 = ssub.s32 %s24, %s36
      %s64 = ssub.s32 %s25, %s32
      %s65 = sor.u32 %s63, %s64
      %p66 = scmp.eq.s32.totalorder %s65, 0
      %s68 = sadd.s32 %s67, 1
      %s69 = scalar_select %p66, %s67, %s68
      %p72 = pneg %p66
      %p73 = scmp.eq.s32.totalorder %s17, 1
      %p74 = por %p72, %p73
      %p75 = scmp.ne.s32.totalorder %s67, %s70
      %p76 = scmp.eq.s32.totalorder %s17, 0
      %p77 = por %p75, %p76
      %p78 = scmp.ne.s32.totalorder %s67, %s70
      %p79 = scmp.eq.s32.totalorder %s22, 1
      %p80 = por %p78, %p79
      %p81 = scmp.ne.s32.totalorder %s70, %s71
      %p82 = scmp.eq.s32.totalorder %s22, 0
      %p83 = por %p81, %p82
      %p84 = scmp.ne.s32.totalorder %s70, %s71
      %p85 = scmp.eq.s32.totalorder %s23, 1
      %p86 = por %p84, %p85
      %p88 = scmp.ne.s32.totalorder %s71, %s87
      %p89 = scmp.eq.s32.totalorder %s23, 0
      %p90 = por %p88, %p89
      %s91 = ssub.s32 %s24, %s36
      %s92 = ssub.s32 %s25, %s32
      %s93 = sor.u32 %s91, %s92
      %p94 = scmp.eq.s32.totalorder %s93, 0
      %s96 = sadd.s32 %s95, 1
      %s97 = scalar_select %p94, %s95, %s96
      %p100 = pneg %p94
      %p101 = scmp.eq.s32.totalorder %s17, 1
      %p102 = por %p100, %p101
      %p103 = scmp.ne.s32.totalorder %s95, %s98
      %p104 = scmp.eq.s32.totalorder %s17, 0
      %p105 = por %p103, %p104
      %p106 = scmp.ne.s32.totalorder %s95, %s98
      %p107 = scmp.eq.s32.totalorder %s22, 1
      %p108 = por %p106, %p107
      %p109 = scmp.ne.s32.totalorder %s98, %s99
      %p110 = scmp.eq.s32.totalorder %s22, 0
      %p111 = por %p109, %p110
      %p112 = scmp.ne.s32.totalorder %s98, %s99
      %p113 = scmp.eq.s32.totalorder %s23, 1
      %p114 = por %p112, %p113
      %p116 = scmp.ne.s32.totalorder %s99, %s115
      %p117 = scmp.eq.s32.totalorder %s23, 0
      %p118 = por %p116, %p117
      %s119 = ssub.s32 %s24, %s36
      %s120 = ssub.s32 %s25, %s32
      %s121 = sor.u32 %s119, %s120
      %p122 = scmp.eq.s32.totalorder %s121, 0
      %s124 = sadd.s32 %s123, 1
      %s125 = scalar_select %p122, %s123, %s124
      %p128 = pneg %p122
      %p129 = scmp.eq.s32.totalorder %s17, 1
      %p130 = por %p128, %p129
      %p131 = scmp.ne.s32.totalorder %s123, %s126
      %p132 = scmp.eq.s32.totalorder %s17, 0
      %p133 = por %p131, %p132
      %p134 = scmp.ne.s32.totalorder %s123, %s126
      %p135 = scmp.eq.s32.totalorder %s22, 1
      %p136 = por %p134, %p135
      %p137 = scmp.ne.s32.totalorder %s126, %s127
      %p138 = scmp.eq.s32.totalorder %s22, 0
      %p139 = por %p137, %p138
      %p140 = scmp.ne.s32.totalorder %s126, %s127
      %p141 = scmp.eq.s32.totalorder %s23, 1
      %p142 = por %p140, %p141
      %p144 = scmp.ne.s32.totalorder %s127, %s143
      %p145 = scmp.eq.s32.totalorder %s23, 0
      %p146 = por %p144, %p145
      %s147 = ssub.s32 %s24, %s36
      %s148 = ssub.s32 %s25, %s32
      %s149 = sor.u32 %s147, %s148
      %p150 = scmp.eq.s32.totalorder %s149, 0
      %s152 = sadd.s32 %s151, 1
      %s153 = scalar_select %p150, %s151, %s152
      %p156 = pneg %p150
      %p157 = scmp.eq.s32.totalorder %s17, 1
      %p158 = por %p156, %p157
      %p159 = scmp.ne.s32.totalorder %s151, %s154
      %p160 = scmp.eq.s32.totalorder %s17, 0
      %p161 = por %p159, %p160
      %p162 = scmp.ne.s32.totalorder %s151, %s154
      %p163 = scmp.eq.s32.totalorder %s22, 1
      %p164 = por %p162, %p163
      %p165 = scmp.ne.s32.totalorder %s154, %s155
      %p166 = scmp.eq.s32.totalorder %s22, 0
      %p167 = por %p165, %p166
      %p168 = scmp.ne.s32.totalorder %s154, %s155
      %p169 = scmp.eq.s32.totalorder %s23, 1
      %p170 = por %p168, %p169
      %p172 = scmp.ne.s32.totalorder %s155, %s171
      %p173 = scmp.eq.s32.totalorder %s23, 0
      %p174 = por %p172, %p173
      %p175 = scmp.le.s32.totalorder 1, %s17
      %p176 = scmp.lt.s32.totalorder %s17, 3
      %p177 = pnand %p175, %p176
      %p178 = pneg %p177
      // Predicated region
      $region9: #{tpu_custom_call.1} parent=5 // pred_check
        _
      $region10: #{tpu_custom_call.1} parent=5 // pred_check_branch
        %180 = sbr.rel (%p177) target = $region12
      $region11: #{tpu_custom_call.1} parent=5 // pred_region
        %s181 = ssub.s32 %s17, 1
      $region12: #{tpu_custom_call.1} parent=5 // pred_fallthru
        _
      %p182 = scmp.lt.s32.totalorder %s17, 2
      // Predicated region
      $region13: #{tpu_custom_call.1} parent=5 // pred_check
        %p183 = pneg %p182
      $region14: #{tpu_custom_call.1} parent=5 // pred_check_branch
        %185 = sbr.rel (%p183) target = $region16
      $region15: #{tpu_custom_call.1} parent=5 // pred_region
        // Predicated region
        $region17: #{tpu_custom_call.1} parent=15 // pred_check
          %p186 = pneg %p49
        $region18: #{tpu_custom_call.1} parent=15 // pred_check_branch
          %188 = sbr.rel (%p186) target = $region20
        $region19: #{tpu_custom_call.1} parent=15 // pred_region
          %s189 = sand.u32 %s39, 1
          %s190 = scalar_lea.sflag [#allocation3], %s189
          %s191 = sand.u32 %s39, 1
          %s192 = scalar_lea.vmem [#allocation2], %s191
          %s194 = ssub.s32 16, 16
          %195 = vsyncadd %s190, %s194
          %s196 = smul.addr %s24, 16
          %s197 = scalar_lea.hbm %s0, %s196
          %s199 = sshll.u32 %s192, 4
          %s200 = int_to_ptr.vmem [resolvable:$true] %s199
          %202 = dma.hbm_to_vmem [thread:$0]  %s197, 16, %s200, %s190
        $region20: #{tpu_custom_call.1} parent=15 // pred_fallthru
          _
        // Predicated region
        $region21: #{tpu_custom_call.1} parent=15 // pred_check
          %p203 = pneg %p77
        $region22: #{tpu_custom_call.1} parent=15 // pred_check_branch
          %205 = sbr.rel (%p203) target = $region24
        $region23: #{tpu_custom_call.1} parent=15 // pred_region
          %s206 = sand.u32 %s17, 1
          %s207 = scalar_lea.sflag [#allocation5], %s206
          %s208 = sand.u32 %s67, 1
          %s209 = smul.addr %s208, 8
          %s210 = scalar_lea.vmem [#allocation4], %s209
          %s212 = ssub.s32 128, 128
          %213 = vsyncadd %s207, %s212
          %s214 = sadd.s32 %s25, %s24
          %s215 = smul.addr %s214, 128
          %s216 = scalar_lea.hbm %s1, %s215
          %s218 = sshll.u32 %s210, 4
          %s219 = int_to_ptr.vmem [resolvable:$true] %s218
          %221 = dma.hbm_to_vmem [thread:$0]  %s216, 128, %s219, %s207
        $region24: #{tpu_custom_call.1} parent=15 // pred_fallthru
          _
        // Predicated region
        $region25: #{tpu_custom_call.1} parent=15 // pred_check
          %p222 = pneg %p105
        $region26: #{tpu_custom_call.1} parent=15 // pred_check_branch
          %224 = sbr.rel (%p222) target = $region28
        $region27: #{tpu_custom_call.1} parent=15 // pred_region
          %s225 = sand.u32 %s17, 1
          %s226 = scalar_lea.sflag [#allocation5], %s225
          %s227 = sand.u32 %s95, 1
          %s228 = smul.addr %s227, 8
          %s229 = scalar_lea.vmem [#allocation6], %s228
          %s231 = ssub.s32 128, 128
          %232 = vsyncadd %s226, %s231
          %s233 = sadd.s32 %s25, %s24
          %s234 = smul.addr %s233, 128
          %s235 = scalar_lea.hbm %s2, %s234
          %s237 = sshll.u32 %s229, 4
          %s238 = int_to_ptr.vmem [resolvable:$true] %s237
          %240 = dma.hbm_to_vmem [thread:$0]  %s235, 128, %s238, %s226
        $region28: #{tpu_custom_call.1} parent=15 // pred_fallthru
          _
      $region16: #{tpu_custom_call.1} parent=5 // pred_fallthru
        _
      %p241 = scmp.le.s32.totalorder 1, %s17
      %p242 = scmp.lt.s32.totalorder %s17, 3
      %p243 = pnand %p241, %p242
      %p244 = pneg %p243
      // Predicated region
      $region29: #{tpu_custom_call.1} parent=5 // pred_check
        _
      $region30: #{tpu_custom_call.1} parent=5 // pred_check_branch
        %246 = sbr.rel (%p243) target = $region32
      $region31: #{tpu_custom_call.1} parent=5 // pred_region
        %s247 = ssub.s32 %s17, 1
        %s248 = sand.u32 %s42, 1
        %s249 = scalar_lea.sflag [#allocation3], %s248
        %s250 = sand.u32 %s42, 1
        %s251 = scalar_lea.vmem [#allocation2], %s250
        // Predicated region
        $region33: #{tpu_custom_call.1} parent=31 // pred_check
          %p252 = pneg %p55
        $region34: #{tpu_custom_call.1} parent=31 // pred_check_branch
          %254 = sbr.rel (%p252) target = $region36
        $region35: #{tpu_custom_call.1} parent=31 // pred_region
          %255 = dma.done %s249, 16
        $region36: #{tpu_custom_call.1} parent=31 // pred_fallthru
          _
        %s256 = sand.u32 %s22, 1
        %s257 = scalar_lea.sflag [#allocation5], %s256
        %s258 = sand.u32 %s70, 1
        %s259 = smul.addr %s258, 8
        %s260 = scalar_lea.vmem [#allocation4], %s259
        // Predicated region
        $region37: #{tpu_custom_call.1} parent=31 // pred_check
          %p261 = pneg %p83
        $region38: #{tpu_custom_call.1} parent=31 // pred_check_branch
          %263 = sbr.rel (%p261) target = $region40
        $region39: #{tpu_custom_call.1} parent=31 // pred_region
          %264 = dma.done %s257, 128
        $region40: #{tpu_custom_call.1} parent=31 // pred_fallthru
          _
        %s265 = sand.u32 %s22, 1
        %s266 = scalar_lea.sflag [#allocation5], %s265
        %s267 = sand.u32 %s98, 1
        %s268 = smul.addr %s267, 8
        %s269 = scalar_lea.vmem [#allocation6], %s268
        // Predicated region
        $region41: #{tpu_custom_call.1} parent=31 // pred_check
          %p270 = pneg %p111
        $region42: #{tpu_custom_call.1} parent=31 // pred_check_branch
          %272 = sbr.rel (%p270) target = $region44
        $region43: #{tpu_custom_call.1} parent=31 // pred_region
          %273 = dma.done %s266, 128
        $region44: #{tpu_custom_call.1} parent=31 // pred_fallthru
          _
        %s274 = sand.u32 %s42, 1
        %s275 = scalar_lea.sflag [#allocation3], %s274
        %s276 = sand.u32 %s42, 1
        %s277 = scalar_lea.vmem [#allocation2], %s276
        %p278 = pneg %p55
        %p279 = pneg %p52
        %s280 = sand.u32 %s22, 1
        %s281 = scalar_lea.sflag [#allocation5], %s280
        %s282 = sand.u32 %s70, 1
        %s283 = smul.addr %s282, 8
        %s284 = scalar_lea.vmem [#allocation4], %s283
        %p285 = pneg %p83
        %p286 = pneg %p80
        %s287 = sand.u32 %s22, 1
        %s288 = scalar_lea.sflag [#allocation5], %s287
        %s289 = sand.u32 %s98, 1
        %s290 = smul.addr %s289, 8
        %s291 = scalar_lea.vmem [#allocation6], %s290
        %p292 = pneg %p111
        %p293 = pneg %p108
        %p294 = pneg %p139
        %p295 = pneg %p136
        %p296 = scmp.lt.s32.totalorder %s26, 1
        %s297 = scalar_select %p296, %s26, 1
        %p298 = scmp.lt.s32.totalorder %s27, 0
        %s299 = scalar_select %p298, %s27, 0
        %s300 = sadd.s32 %s299, %s297
        %s301 = smul.addr %s300, 8
        %s302 = scalar_lea.vmem %s3, %s301
        %p303 = pneg %p167
        %p304 = pneg %p164
        %p305 = scmp.lt.s32.totalorder %s26, 1
        %s306 = scalar_select %p305, %s26, 1
        %p307 = scmp.lt.s32.totalorder %s27, 0
        %s308 = scalar_select %p307, %s27, 0
        %s309 = sadd.s32 %s308, %s306
        %s310 = smul.addr %s309, 8
        %s311 = scalar_lea.vmem %s4, %s310
        %p312 = scmp.lt.s32.totalorder %s26, 1
        %s313 = scalar_select %p312, %s26, 1
        %p314 = scmp.lt.s32.totalorder %s27, 0
        %s315 = scalar_select %p314, %s27, 0
        %s316 = sadd.s32 %s315, %s313
        %s317 = smul.addr %s316, 8
        %s318 = scalar_lea.vmem %s3, %s317
        %p319 = scmp.lt.s32.totalorder %s26, 1
        %s320 = scalar_select %p319, %s26, 1
        %p321 = scmp.lt.s32.totalorder %s27, 0
        %s322 = scalar_select %p321, %s27, 0
        %s323 = sadd.s32 %s322, %s320
        %s324 = smul.addr %s323, 8
        %s325 = scalar_lea.vmem %s4, %s324
        %v326 = vld [vmem:[%s251] sm:$0x1]
        %v327 = vld [vmem:[%s260] sm:$0xff]
        %v328 = vld [vmem:[%s269] sm:$0xff]
        %v330 = vlaneseq
        %v331 = vshrl.u32 %v330, 7
        %v332 = vsub.s32 0, %v331
        %v333 = vrot.slane %v326, %v332
        %v335 = vmul.f32 %v327, %v333
        %vm336 = vcmask 261120
        %v337 = vsel %vm336, %v335, 0.0
        %338 = vadd.xlane.f32.xlu0 %v337
        %v339 = vpop.xlane.xlu0 %338
        %vm340 = vcmask 7168
        %341 = vst.msk [vmem:[%s318] sm:$0xff] %vm340, %v339
        %v342 = vmul.f32 %v328, %v333
        %v343 = vsel %vm336, %v342, 0.0
        %344 = vadd.xlane.f32.xlu0 %v343
        %v345 = vpop.xlane.xlu0 %344
        %346 = vst.msk [vmem:[%s325] sm:$0xff] %vm340, %v345
        %p347 = scmp.lt.s32.totalorder %s26, 1
        %s348 = scalar_select %p347, %s26, 1
        %p349 = scmp.lt.s32.totalorder %s27, 0
        %s350 = scalar_select %p349, %s27, 0
        %s351 = sadd.s32 %s350, %s348
        %s352 = smul.addr %s351, 8
        %s353 = scalar_lea.vmem %s3, %s352
        %p354 = scmp.lt.s32.totalorder %s26, 1
        %s355 = scalar_select %p354, %s26, 1
        %p356 = scmp.lt.s32.totalorder %s27, 0
        %s357 = scalar_select %p356, %s27, 0
        %s358 = sadd.s32 %s357, %s355
        %s359 = smul.addr %s358, 8
        %s360 = scalar_lea.vmem %s4, %s359
        // Predicated region
        $region45: #{tpu_custom_call.1} parent=31 // pred_check
          %p361 = pneg %p136
        $region46: #{tpu_custom_call.1} parent=31 // pred_check_branch
          %363 = sbr.rel (%p361) target = $region48
        $region47: #{tpu_custom_call.1} parent=31 // pred_region
          _
        $region48: #{tpu_custom_call.1} parent=31 // pred_fallthru
          _
        // Predicated region
        $region49: #{tpu_custom_call.1} parent=31 // pred_check
          %p364 = pneg %p164
        $region50: #{tpu_custom_call.1} parent=31 // pred_check_branch
          %366 = sbr.rel (%p364) target = $region52
        $region51: #{tpu_custom_call.1} parent=31 // pred_region
          _
        $region52: #{tpu_custom_call.1} parent=31 // pred_fallthru
          _
      $region32: #{tpu_custom_call.1} parent=5 // pred_fallthru
        _
      %p367 = scmp.le.s32.totalorder 2, %s17
      // Predicated region
      $region53: #{tpu_custom_call.1} parent=5 // pred_check
        %p368 = pneg %p367
      $region54: #{tpu_custom_call.1} parent=5 // pred_check_branch
        %370 = sbr.rel (%p368) target = $region56
      $region55: #{tpu_custom_call.1} parent=5 // pred_region
        %s371 = ssub.s32 %s17, 2
        // Predicated region
        $region57: #{tpu_custom_call.1} parent=55 // pred_check
          %p372 = pneg %p142
        $region58: #{tpu_custom_call.1} parent=55 // pred_check_branch
          %374 = sbr.rel (%p372) target = $region60
        $region59: #{tpu_custom_call.1} parent=55 // pred_region
          %p375 = scmp.lt.s32.totalorder %s28, 1
          %s376 = scalar_select %p375, %s28, 1
          %p377 = scmp.lt.s32.totalorder %s29, 0
          %s378 = scalar_select %p377, %s29, 0
          %s379 = sadd.s32 %s378, %s376
          %s380 = smul.addr %s379, 8
          %s381 = scalar_lea.vmem %s3, %s380
        $region60: #{tpu_custom_call.1} parent=55 // pred_fallthru
          _
        // Predicated region
        $region61: #{tpu_custom_call.1} parent=55 // pred_check
          %p382 = pneg %p170
        $region62: #{tpu_custom_call.1} parent=55 // pred_check_branch
          %384 = sbr.rel (%p382) target = $region64
        $region63: #{tpu_custom_call.1} parent=55 // pred_region
          %p385 = scmp.lt.s32.totalorder %s28, 1
          %s386 = scalar_select %p385, %s28, 1
          %p387 = scmp.lt.s32.totalorder %s29, 0
          %s388 = scalar_select %p387, %s29, 0
          %s389 = sadd.s32 %s388, %s386
          %s390 = smul.addr %s389, 8
          %s391 = scalar_lea.vmem %s4, %s390
        $region64: #{tpu_custom_call.1} parent=55 // pred_fallthru
          _
      $region56: #{tpu_custom_call.1} parent=5 // pred_fallthru
        _
    $region6: #{tpu_custom_call.1} parent=1 // loop_footer
      %s21 = sadd.s32 1, %s17
    $region7: #{tpu_custom_call.1} parent=1 // loop_footer_branch
      %16 = sbr.rel target = $region3
    $region8: #{tpu_custom_call.1} parent=1 // loop_exit
      _
    %392 = vsyncpa [#allocation3], 1
    %s393 = scalar_lea.sflag [#allocation3], 1
    %394 = vsyncpa %s393, 1
    %395 = vsyncpa [#allocation5], 1
    %s396 = scalar_lea.sflag [#allocation5], 1
    %397 = vsyncpa %s396, 1

</llo_original>
